<compile_context>
chip_gen: v6e
topology: v6e:2x2x1
jax: 0.10.0
libtpu: 0.0.40
codegen_flags: <defaults>
</compile_context>

<pallas_src>
import jax
import jax.numpy as jnp
from jax.experimental import pallas as pl
from jax.experimental.pallas import tpu as pltpu

_TARGET_BLOCK_BYTES = 4 << 20          # ~4 MiB x-blocks (good on v5e/v6e/v7x)
_VMEM_LIMIT = 48 * 1024 * 1024         # worst case live ≈ 24 MiB; < 64 MiB v7x physical


def _pick_time_chunk(T, row_bytes, target_bytes=_TARGET_BLOCK_BYTES):
    """Pick a chunk length along T.

    Returns (tt, n_chunks, has_tail). tt is either the full T, or a multiple of
    128 (so the block's lane dim is conformant). Prefers an exact divisor of T;
    if none exists in a useful range, uses a cdiv grid (has_tail=True) and the
    kernel masks the padded lanes out of the logdet sum.
    """
    if T * row_bytes <= target_bytes:
        return T, 1, False
    max_tt = max(128, (int(target_bytes // row_bytes) // 128) * 128)
    cand = min(max_tt, (T // 128) * 128)
    if cand < 128:
        # T < 128 but a single row is huge: just take the full extent.
        return T, 1, False
    # Prefer an exact divisor, but only if it is not much smaller than cand
    # (tiny exact divisors would reintroduce per-step overhead).
    for c in range(cand, max(127, cand // 2 - 1), -128):
        if T % c == 0:
            return c, T // c, False
    return cand, int(pl.cdiv(T, cand)), True


# ---------------- kernels ----------------

def _make_fwd_kernel(T, tt, has_mask, has_tail):
    """Forward: y = log(max(x,1e-5)) [* mask]; emit per-chunk partial -sum(y)."""

    def kernel(*refs):
        if has_mask:
            x_ref, m_ref, y_ref, pld_ref = refs
        else:
            x_ref, y_ref, pld_ref = refs

        x = x_ref[...].astype(jnp.float32)                 # (1, C, tt)
        y = jnp.log(jnp.maximum(x, 1e-5))
        if has_mask:
            # (1, Cm, tt), Cm in {1, C}: sublane broadcast happens on the VPU.
            y = y * m_ref[...].astype(jnp.float32)
        y_ref[...] = y.astype(y_ref.dtype)

        if has_tail:
            # Exclude out-of-bounds lanes of the (possibly partial) last block
            # from the logdet sum.  OOB output lanes are dropped by Pallas.
            t = pl.program_id(1)
            off = t * tt + jax.lax.broadcasted_iota(jnp.int32, y.shape, 2)
            y = jnp.where(off < T, y, 0.0)

        # Per-chunk partial logdet, broadcast into a full conformant (8,128) tile.
        pld_ref[...] = jnp.full(pld_ref.shape, -jnp.sum(y), dtype=pld_ref.dtype)

    return kernel


def _make_inv_kernel(has_mask):
    """Inverse: out = exp(x) [* mask]."""

    def kernel(*refs):
        if has_mask:
            x_ref, m_ref, o_ref = refs
        else:
            x_ref, o_ref = refs
        v = jnp.exp(x_ref[...].astype(jnp.float32))
        if has_mask:
            v = v * m_ref[...].astype(jnp.float32)
        o_ref[...] = v.astype(o_ref.dtype)

    return kernel


# ---------------- wrapper ----------------

def log_flow(x, mask=None, reverse=False, target_block_bytes=_TARGET_BLOCK_BYTES):
    """Pallas equivalent of Log.forward. x: (B, C, T); mask: None, (B,1,T) or (B,C,T)."""
    B, C, T = x.shape
    itemsize = jnp.dtype(x.dtype).itemsize
    n_elem = B * C * T

    tt, n_chunks, has_tail = _pick_time_chunk(T, C * itemsize, target_block_bytes)

    x_blk = pl.BlockSpec((1, C, tt), lambda b, t: (b, 0, t))
    in_specs = [x_blk]
    args = [x]

    has_mask = mask is not None
    mask_bytes = 0
    if has_mask:
        Bm, Cm, Tm = mask.shape
        assert (Bm, Tm) == (B, T) and Cm in (1, C), "mask must be (B,1,T) or (B,C,T)"
        in_specs.append(pl.BlockSpec((1, Cm, tt), lambda b, t: (b, 0, t)))
        args.append(mask)
        mask_bytes = B * Cm * T * jnp.dtype(mask.dtype).itemsize

    cparams = pltpu.CompilerParams(
        dimension_semantics=("parallel", "parallel"),
        vmem_limit_bytes=_VMEM_LIMIT,
    )

    if not reverse:
        cost = pl.CostEstimate(
            flops=(3 if has_mask else 2) * n_elem,
            transcendentals=n_elem,
            bytes_accessed=2 * n_elem * itemsize + mask_bytes
            + B * n_chunks * 8 * 128 * 4,
        )
        y, pld = pl.pallas_call(
            _make_fwd_kernel(T, tt, has_mask, has_tail),
            out_shape=(
                jax.ShapeDtypeStruct((B, C, T), x.dtype),
                # per-(batch, chunk) partial logdet replicated over a full tile
                jax.ShapeDtypeStruct((B, n_chunks, 8, 128), jnp.float32),
            ),
            grid_spec=pltpu.PrefetchScalarGridSpec(
                num_scalar_prefetch=0,
                grid=(B, n_chunks),
                in_specs=in_specs,
                out_specs=[
                    x_blk,
                    pl.BlockSpec((1, 1, 8, 128), lambda b, t: (b, t, 0, 0)),
                ],
            ),
            compiler_params=cparams,
            cost_estimate=cost,
        )(*args)
        # Tiny reduction over chunk partials (all 1024 entries of each tile are
        # identical; take lane [0,0]).  logdet kept in f32 for accuracy.
        logdet = jnp.sum(pld[:, :, 0, 0], axis=1)
        return y, logdet
    else:
        cost = pl.CostEstimate(
            flops=(2 if has_mask else 1) * n_elem,
            transcendentals=n_elem,
            bytes_accessed=2 * n_elem * itemsize + mask_bytes,
        )
        out = pl.pallas_call(
            _make_inv_kernel(has_mask),
            out_shape=jax.ShapeDtypeStruct((B, C, T), x.dtype),
            grid_spec=pltpu.PrefetchScalarGridSpec(
                num_scalar_prefetch=0,
                grid=(B, n_chunks),
                in_specs=in_specs,
                out_specs=x_blk,
            ),
            compiler_params=cparams,
            cost_estimate=cost,
        )(*args)
        return out


if __name__ == "__main__":
    key = jax.random.PRNGKey(0)
    kx, km = jax.random.split(key)
    B, C, T = 2, 4, 16
    # positive-ish inputs (the flow layer normally sees durations > 0); include
    # tiny values to exercise the clamp.
    x = jnp.abs(jax.random.normal(kx, (B, C, T), dtype=jnp.float32)) + 1e-7
    # mask kept in its natural (B, 1, T) shape — broadcast happens in the kernel
    mask = (jax.random.uniform(km, (B, 1, T)) > 0.2).astype(jnp.float32)

    # --- forward path (masked) ---
    y, logdet = log_flow(x, mask=mask, reverse=False)
    jax.block_until_ready((y, logdet))
    y_ref = jnp.log(jnp.maximum(x, 1e-5)) * mask          # broadcasts over C
    logdet_ref = jnp.sum(-y_ref, axis=(1, 2))
    assert jnp.allclose(y, y_ref, atol=1e-5, rtol=1e-5)
    assert jnp.allclose(logdet, logdet_ref, atol=1e-4, rtol=1e-5)

    # --- reverse path (masked) ---
    xr = log_flow(y, mask=mask, reverse=True)
    jax.block_until_ready(xr)
    assert jnp.allclose(xr, jnp.exp(y_ref) * mask, atol=1e-5, rtol=1e-5)

    # --- no-mask forward / reverse (same (B,C,T) blocking, no mask operand) ---
    y2, ld2 = log_flow(x, mask=None, reverse=False)
    jax.block_until_ready((y2, ld2))
    y2_ref = jnp.log(jnp.maximum(x, 1e-5))
    assert jnp.allclose(y2, y2_ref, atol=1e-5, rtol=1e-5)
    assert jnp.allclose(ld2, jnp.sum(-y2_ref, axis=(1, 2)), atol=1e-4, rtol=1e-5)

    x2r = log_flow(y2, mask=None, reverse=True)
    jax.block_until_ready(x2r)
    assert jnp.allclose(x2r, jnp.exp(y2_ref), atol=1e-5, rtol=1e-5)

    # --- multi-chunk path (exact-divisor chunking, exercises per-chunk partial
    #     logdet + wrapper reduction) using a deliberately tiny block target ---
    xb = jnp.abs(jax.random.normal(jax.random.PRNGKey(1), (1, 4, 384),
                                   dtype=jnp.float32)) + 1e-7
    yb, ldb = log_flow(xb, mask=None, reverse=False, target_block_bytes=4096)
    jax.block_until_ready((yb, ldb))
    yb_ref = jnp.log(jnp.maximum(xb, 1e-5))
    assert jnp.allclose(yb, yb_ref, atol=1e-5, rtol=1e-5)
    assert jnp.allclose(ldb, jnp.sum(-yb_ref, axis=(1, 2)), atol=1e-3, rtol=1e-5)

    print("KERNEL_OK")
</pallas_src>

<mosaic_0001>
module attributes {stable_mosaic.version = 11 : i64} {
  func.func @kernel(%arg0: i32, %arg1: i32, %arg2: memref<1x4x16xf32, #tpu.memory_space<vmem>>, %arg3: memref<1x1x16xf32, #tpu.memory_space<vmem>>, %arg4: memref<1x4x16xf32, #tpu.memory_space<vmem>>, %arg5: memref<1x1x8x128xf32, #tpu.memory_space<vmem>>) attributes {dimension_semantics = [#tpu.dimension_semantics<parallel>, #tpu.dimension_semantics<parallel>], iteration_bounds = array<i64: 2, 1>, scalar_prefetch = 0 : i64, scratch_operands = 0 : i64, tpu.core_type = #tpu.core_type<tc>, window_params = [{transform_indices = @transform_0, window_bounds = array<i64: 1, 4, 16>}, {transform_indices = @transform_1, window_bounds = array<i64: 1, 1, 16>}, {transform_indices = @transform_2, window_bounds = array<i64: 1, 4, 16>}, {transform_indices = @transform_3, window_bounds = array<i64: 1, 1, 8, 128>}]} {
    %c0 = arith.constant 0 : index
    %c0_0 = arith.constant 0 : index
    %c0_1 = arith.constant 0 : index
    %0 = vector.load %arg2[%c0, %c0_0, %c0_1] : memref<1x4x16xf32, #tpu.memory_space<vmem>>, vector<1x4x16xf32>
    %cst = arith.constant 9.99999974E-6 : f32
    %1 = vector.broadcast %cst : f32 to vector<1x4x16xf32>
    %2 = arith.maximumf %0, %1 : vector<1x4x16xf32>
    %3 = math.log %2 : vector<1x4x16xf32>
    %c0_2 = arith.constant 0 : index
    %c0_3 = arith.constant 0 : index
    %c0_4 = arith.constant 0 : index
    %4 = vector.load %arg3[%c0_2, %c0_3, %c0_4] : memref<1x1x16xf32, #tpu.memory_space<vmem>>, vector<1x1x16xf32>
    %5 = vector.broadcast %4 : vector<1x1x16xf32> to vector<1x4x16xf32>
    %6 = arith.mulf %3, %5 : vector<1x4x16xf32>
    %c0_5 = arith.constant 0 : index
    %c0_6 = arith.constant 0 : index
    %c0_7 = arith.constant 0 : index
    %7 = vector.load %arg4[%c0_5, %c0_6, %c0_7] : memref<1x4x16xf32, #tpu.memory_space<vmem>>, vector<1x4x16xf32>
    tpu.vector_store %arg4[%c0_5, %c0_6, %c0_7], %6 {strides = array<i32>} : memref<1x4x16xf32, #tpu.memory_space<vmem>>, vector<1x4x16xf32>,
    %8 = vector.shape_cast %6 : vector<1x4x16xf32> to vector<1x1x4x16xf32>
    %cst_8 = arith.constant dense<0.000000e+00> : vector<1xf32>
    %9 = vector.multi_reduction <add>, %8, %cst_8 [1, 2, 3] : vector<1x1x4x16xf32> to vector<1xf32>
    %10 = vector.shape_cast %9 : vector<1xf32> to vector<1x1x1x1xf32>
    %11 = vector.extract %10[0, 0, 0, 0] : f32 from vector<1x1x1x1xf32>
    %cst_9 = arith.constant 0.000000e+00 : f32
    %12 = arith.subf %cst_9, %11 : f32
    %13 = vector.broadcast %12 : f32 to vector<1x1x8x128xf32>
    %c0_10 = arith.constant 0 : index
    %c0_11 = arith.constant 0 : index
    %c0_12 = arith.constant 0 : index
    %c0_13 = arith.constant 0 : index
    %14 = vector.load %arg5[%c0_10, %c0_11, %c0_12, %c0_13] : memref<1x1x8x128xf32, #tpu.memory_space<vmem>>, vector<1x1x8x128xf32>
    tpu.vector_store %arg5[%c0_10, %c0_11, %c0_12, %c0_13], %13 {strides = array<i32>} : memref<1x1x8x128xf32, #tpu.memory_space<vmem>>, vector<1x1x8x128xf32>,
    return
  }
  func.func @transform_0(%arg0: i32, %arg1: i32) -> (i32, i32, i32) {
    %c0_i32 = arith.constant 0 : i32
    %c0_i32_0 = arith.constant 0 : i32
    return %arg0, %c0_i32, %arg1 : i32, i32, i32
  }
  func.func @transform_1(%arg0: i32, %arg1: i32) -> (i32, i32, i32) {
    %c0_i32 = arith.constant 0 : i32
    %c0_i32_0 = arith.constant 0 : i32
    return %arg0, %c0_i32, %arg1 : i32, i32, i32
  }
  func.func @transform_2(%arg0: i32, %arg1: i32) -> (i32, i32, i32) {
    %c0_i32 = arith.constant 0 : i32
    %c0_i32_0 = arith.constant 0 : i32
    return %arg0, %c0_i32, %arg1 : i32, i32, i32
  }
  func.func @transform_3(%arg0: i32, %arg1: i32) -> (i32, i32, i32, i32) {
    %c0_i32 = arith.constant 0 : i32
    %c0_i32_0 = arith.constant 0 : i32
    %c0_i32_1 = arith.constant 0 : i32
    return %arg0, %arg1, %c0_i32, %c0_i32_0 : i32, i32, i32, i32
  }
}

</mosaic_0001>

<llo_original>
// kernel: tpu_custom_call.1
$region0: #{tpu_custom_call.1}
  #allocation0 [shape = 'u32[]', space=smem, size = 0x4, offset = 0x4, fixed_abs, tag = 'smem constant byte address 0x4 - core index']
  #allocation1 [shape = 'u32[144,128]{1,0:T(1,128)}', space=vmem, size = 0x12000, scoped, tag = 'internal scratch']
  %s0 = inlined_call_operand.hbm [shape: f32[2,4,16], index: 0, kind: input, shape index: {}]
  %s1 = inlined_call_operand.hbm [shape: f32[2,1,16], index: 1, kind: input, shape index: {}]
  %s2 = inlined_call_operand.hbm [shape: f32[2,4,16], index: 2, kind: output, shape index: {0}]
  %s3 = inlined_call_operand.hbm [shape: f32[2,1,8,128], index: 3, kind: output, shape index: {1}]
  %4 = xla_tuple %s2, %s3
  %s5 = sld [smem:[#allocation0]]
  $region57: #{tpu_custom_call.1} parent=0
    _
  %s7 = ssub.s32 1, %s5
  %s8 = scalar_select 0, %s7, %s5
  $region1: #{tpu_custom_call.1} parent=0
    #allocation2 [shape = 'u8[4096]{0}', space=vmem, size = 0x1000, scoped, tag = 'input window, operand 0']
    #allocation3 [shape = 's32[2]{0}', space=sflag, size = 0x8, scoped, tag = 'scoped memory for tpu_custom_call.1']
    #allocation4 [shape = 's32[2]{0}', space=sflag, size = 0x8, scoped, tag = 'scoped memory for tpu_custom_call.1']
    #allocation5 [shape = 'u8[1024]{0}', space=vmem, size = 0x400, scoped, tag = 'input window, operand 1']
    #allocation6 [shape = 's32[2]{0}', space=sflag, size = 0x8, scoped, tag = 'scoped memory for tpu_custom_call.1']
    #allocation7 [shape = 'u8[4096]{0}', space=vmem, size = 0x1000, scoped, tag = 'output window, operand 0']
    #allocation8 [shape = 'u8[8192]{0}', space=vmem, size = 0x2000, scoped, tag = 'output window, operand 1']
    #allocation9 [shape = 's32[2]{0}', space=sflag, size = 0x8, scoped, tag = 'scoped memory for tpu_custom_call.1']
    %9 = vsyncpa [#allocation3], 0
    %s10 = scalar_lea.sflag [#allocation3], 1
    %11 = vsyncpa %s10, 0
    %12 = vsyncpa [#allocation6], 0
    %s13 = scalar_lea.sflag [#allocation6], 1
    %14 = vsyncpa %s13, 0
    %15 = vsyncpa [#allocation4], 0
    %s16 = scalar_lea.sflag [#allocation4], 1
    %17 = vsyncpa %s16, 0
    %18 = vsyncpa [#allocation9], 0
    %s19 = scalar_lea.sflag [#allocation9], 1
    %20 = vsyncpa %s19, 0
    loop: start=0, step=1, limit=4
    $region2: #{tpu_custom_call.1} parent=1 // loop_pre_header
      _
    $region3: #{tpu_custom_call.1} parent=1 // loop_header
      %s22 = sphi 0, %s26
      %p23 = scmp.ge.s32.totalorder %s22, 4
      %s29 = sphi 0, %s41
      %s30 = sphi 0, %s37
      %s31 = sphi 0, %s29
      %s32 = sphi 0, %s30
      %s33 = sphi 0, %s31
      %s34 = sphi 0, %s32
      %s46 = sphi 0, %s48
      %s49 = sphi 0, %s46
      %s50 = sphi 0, %s49
      %s66 = sphi 0, %s50
      %s74 = sphi 0, %s76
      %s77 = sphi 0, %s74
      %s78 = sphi 0, %s77
      %s94 = sphi 0, %s78
      %s102 = sphi 0, %s104
      %s105 = sphi 0, %s102
      %s106 = sphi 0, %s105
      %s122 = sphi 0, %s106
      %s130 = sphi 0, %s132
      %s133 = sphi 0, %s130
      %s134 = sphi 0, %s133
      %s150 = sphi 0, %s134
    $region4: #{tpu_custom_call.1} parent=1 // loop_header_branch
      %25 = sbr.rel (%p23) target = $region8
    $region5: #{tpu_custom_call.1} parent=1 // loop_body
      %s27 = ssub.s32 %s22, 1
      %s28 = ssub.s32 %s22, 2
      %s35 = sadd.s32 1, %s30
      %p36 = scmp.ge.s32.totalorder %s35, 1
      %s37 = scalar_select %p36, 0, %s35
      %s38 = sadd.s32 1, %s29
      %s39 = scalar_select %p36, %s38, %s29
      %p40 = scmp.ge.s32.totalorder %s39, 2
      %s41 = scalar_select %p40, 0, %s39
      %s42 = ssub.s32 %s29, %s41
      %s43 = ssub.s32 %s30, %s37
      %s44 = sor.u32 %s42, %s43
      %p45 = scmp.eq.s32.totalorder %s44, 0
      %s47 = sadd.s32 %s46, 1
      %s48 = scalar_select %p45, %s46, %s47
      %p51 = pneg %p45
      %p52 = scmp.eq.s32.totalorder %s22, 1
      %p53 = por %p51, %p52
      %p54 = scmp.ne.s32.totalorder %s46, %s49
      %p55 = scmp.eq.s32.totalorder %s22, 0
      %p56 = por %p54, %p55
      %p57 = scmp.ne.s32.totalorder %s46, %s49
      %p58 = scmp.eq.s32.totalorder %s27, 1
      %p59 = por %p57, %p58
      %p60 = scmp.ne.s32.totalorder %s49, %s50
      %p61 = scmp.eq.s32.totalorder %s27, 0
      %p62 = por %p60, %p61
      %p63 = scmp.ne.s32.totalorder %s49, %s50
      %p64 = scmp.eq.s32.totalorder %s28, 1
      %p65 = por %p63, %p64
      %p67 = scmp.ne.s32.totalorder %s50, %s66
      %p68 = scmp.eq.s32.totalorder %s28, 0
      %p69 = por %p67, %p68
      %s70 = ssub.s32 %s29, %s41
      %s71 = ssub.s32 %s30, %s37
      %s72 = sor.u32 %s70, %s71
      %p73 = scmp.eq.s32.totalorder %s72, 0
      %s75 = sadd.s32 %s74, 1
      %s76 = scalar_select %p73, %s74, %s75
      %p79 = pneg %p73
      %p80 = scmp.eq.s32.totalorder %s22, 1
      %p81 = por %p79, %p80
      %p82 = scmp.ne.s32.totalorder %s74, %s77
      %p83 = scmp.eq.s32.totalorder %s22, 0
      %p84 = por %p82, %p83
      %p85 = scmp.ne.s32.totalorder %s74, %s77
      %p86 = scmp.eq.s32.totalorder %s27, 1
      %p87 = por %p85, %p86
      %p88 = scmp.ne.s32.totalorder %s77, %s78
      %p89 = scmp.eq.s32.totalorder %s27, 0
      %p90 = por %p88, %p89
      %p91 = scmp.ne.s32.totalorder %s77, %s78
      %p92 = scmp.eq.s32.totalorder %s28, 1
      %p93 = por %p91, %p92
      %p95 = scmp.ne.s32.totalorder %s78, %s94
      %p96 = scmp.eq.s32.totalorder %s28, 0
      %p97 = por %p95, %p96
      %s98 = ssub.s32 %s29, %s41
      %s99 = ssub.s32 %s30, %s37
      %s100 = sor.u32 %s98, %s99
      %p101 = scmp.eq.s32.totalorder %s100, 0
      %s103 = sadd.s32 %s102, 1
      %s104 = scalar_select %p101, %s102, %s103
      %p107 = pneg %p101
      %p108 = scmp.eq.s32.totalorder %s22, 1
      %p109 = por %p107, %p108
      %p110 = scmp.ne.s32.totalorder %s102, %s105
      %p111 = scmp.eq.s32.totalorder %s22, 0
      %p112 = por %p110, %p111
      %p113 = scmp.ne.s32.totalorder %s102, %s105
      %p114 = scmp.eq.s32.totalorder %s27, 1
      %p115 = por %p113, %p114
      %p116 = scmp.ne.s32.totalorder %s105, %s106
      %p117 = scmp.eq.s32.totalorder %s27, 0
      %p118 = por %p116, %p117
      %p119 = scmp.ne.s32.totalorder %s105, %s106
      %p120 = scmp.eq.s32.totalorder %s28, 1
      %p121 = por %p119, %p120
      %p123 = scmp.ne.s32.totalorder %s106, %s122
      %p124 = scmp.eq.s32.totalorder %s28, 0
      %p125 = por %p123, %p124
      %s126 = ssub.s32 %s29, %s41
      %s127 = ssub.s32 %s30, %s37
      %s128 = sor.u32 %s126, %s127
      %p129 = scmp.eq.s32.totalorder %s128, 0
      %s131 = sadd.s32 %s130, 1
      %s132 = scalar_select %p129, %s130, %s131
      %p135 = pneg %p129
      %p136 = scmp.eq.s32.totalorder %s22, 1
      %p137 = por %p135, %p136
      %p138 = scmp.ne.s32.totalorder %s130, %s133
      %p139 = scmp.eq.s32.totalorder %s22, 0
      %p140 = por %p138, %p139
      %p141 = scmp.ne.s32.totalorder %s130, %s133
      %p142 = scmp.eq.s32.totalorder %s27, 1
      %p143 = por %p141, %p142
      %p144 = scmp.ne.s32.totalorder %s133, %s134
      %p145 = scmp.eq.s32.totalorder %s27, 0
      %p146 = por %p144, %p145
      %p147 = scmp.ne.s32.totalorder %s133, %s134
      %p148 = scmp.eq.s32.totalorder %s28, 1
      %p149 = por %p147, %p148
      %p151 = scmp.ne.s32.totalorder %s134, %s150
      %p152 = scmp.eq.s32.totalorder %s28, 0
      %p153 = por %p151, %p152
      %p154 = scmp.le.s32.totalorder 1, %s22
      %p155 = scmp.lt.s32.totalorder %s22, 3
      %p156 = pnand %p154, %p155
      %p157 = pneg %p156
      // Predicated region
      $region9: #{tpu_custom_call.1} parent=5 // pred_check
        _
      $region10: #{tpu_custom_call.1} parent=5 // pred_check_branch
        %159 = sbr.rel (%p156) target = $region12
      $region11: #{tpu_custom_call.1} parent=5 // pred_region
        %s160 = ssub.s32 %s22, 1
      $region12: #{tpu_custom_call.1} parent=5 // pred_fallthru
        _
      %p161 = scmp.lt.s32.totalorder %s22, 2
      // Predicated region
      $region13: #{tpu_custom_call.1} parent=5 // pred_check
        %p162 = pneg %p161
      $region14: #{tpu_custom_call.1} parent=5 // pred_check_branch
        %164 = sbr.rel (%p162) target = $region16
      $region15: #{tpu_custom_call.1} parent=5 // pred_region
        // Predicated region
        $region17: #{tpu_custom_call.1} parent=15 // pred_check
          %p165 = pneg %p56
        $region18: #{tpu_custom_call.1} parent=15 // pred_check_branch
          %167 = sbr.rel (%p165) target = $region20
        $region19: #{tpu_custom_call.1} parent=15 // pred_region
          %s168 = sand.u32 %s46, 1
          %s169 = scalar_lea.sflag [#allocation3], %s168
          %s170 = sand.u32 %s46, 1
          %s171 = smul.addr %s170, 4
          %s172 = scalar_lea.vmem [#allocation2], %s171
          %s174 = ssub.s32 64, 64
          %175 = vsyncadd %s169, %s174
          %s176 = sadd.s32 %s30, %s29
          %s177 = smul.addr %s176, 64
          %s178 = scalar_lea.hbm %s0, %s177
          %s180 = sshll.u32 %s172, 4
          %s181 = int_to_ptr.vmem [resolvable:$true] %s180
          %183 = dma.hbm_to_vmem [thread:$0]  %s178, 64, %s181, %s169
        $region20: #{tpu_custom_call.1} parent=15 // pred_fallthru
          _
        // Predicated region
        $region21: #{tpu_custom_call.1} parent=15 // pred_check
          %p184 = pneg %p84
        $region22: #{tpu_custom_call.1} parent=15 // pred_check_branch
          %186 = sbr.rel (%p184) target = $region24
        $region23: #{tpu_custom_call.1} parent=15 // pred_region
          %s187 = sand.u32 %s74, 1
          %s188 = scalar_lea.sflag [#allocation6], %s187
          %s189 = sand.u32 %s74, 1
          %s190 = scalar_lea.vmem [#allocation5], %s189
          %s192 = ssub.s32 16, 16
          %193 = vsyncadd %s188, %s192
          %s194 = sadd.s32 %s30, %s29
          %s195 = smul.addr %s194, 16
          %s196 = scalar_lea.hbm %s1, %s195
          %s198 = sshll.u32 %s190, 4
          %s199 = int_to_ptr.vmem [resolvable:$true] %s198
          %201 = dma.hbm_to_vmem [thread:$0]  %s196, 16, %s199, %s188
        $region24: #{tpu_custom_call.1} parent=15 // pred_fallthru
          _
      $region16: #{tpu_custom_call.1} parent=5 // pred_fallthru
        _
      %p202 = scmp.le.s32.totalorder 1, %s22
      %p203 = scmp.lt.s32.totalorder %s22, 3
      %p204 = pnand %p202, %p203
      %p205 = pneg %p204
      // Predicated region
      $region25: #{tpu_custom_call.1} parent=5 // pred_check
        _
      $region26: #{tpu_custom_call.1} parent=5 // pred_check_branch
        %207 = sbr.rel (%p204) target = $region28
      $region27: #{tpu_custom_call.1} parent=5 // pred_region
        %s208 = ssub.s32 %s22, 1
        %s209 = sand.u32 %s49, 1
        %s210 = scalar_lea.sflag [#allocation3], %s209
        %s211 = sand.u32 %s49, 1
        %s212 = smul.addr %s211, 4
        %s213 = scalar_lea.vmem [#allocation2], %s212
        // Predicated region
        $region29: #{tpu_custom_call.1} parent=27 // pred_check
          %p214 = pneg %p62
        $region30: #{tpu_custom_call.1} parent=27 // pred_check_branch
          %216 = sbr.rel (%p214) target = $region32
        $region31: #{tpu_custom_call.1} parent=27 // pred_region
          %217 = dma.done %s210, 64
        $region32: #{tpu_custom_call.1} parent=27 // pred_fallthru
          _
        %s218 = sand.u32 %s77, 1
        %s219 = scalar_lea.sflag [#allocation6], %s218
        %s220 = sand.u32 %s77, 1
        %s221 = scalar_lea.vmem [#allocation5], %s220
        // Predicated region
        $region33: #{tpu_custom_call.1} parent=27 // pred_check
          %p222 = pneg %p90
        $region34: #{tpu_custom_call.1} parent=27 // pred_check_branch
          %224 = sbr.rel (%p222) target = $region36
        $region35: #{tpu_custom_call.1} parent=27 // pred_region
          %225 = dma.done %s219, 16
        $region36: #{tpu_custom_call.1} parent=27 // pred_fallthru
          _
        %s226 = sand.u32 %s49, 1
        %s227 = scalar_lea.sflag [#allocation3], %s226
        %s228 = sand.u32 %s49, 1
        %s229 = smul.addr %s228, 4
        %s230 = scalar_lea.vmem [#allocation2], %s229
        %p231 = pneg %p62
        %p232 = pneg %p59
        %s233 = sand.u32 %s77, 1
        %s234 = scalar_lea.sflag [#allocation6], %s233
        %s235 = sand.u32 %s77, 1
        %s236 = scalar_lea.vmem [#allocation5], %s235
        %p237 = pneg %p90
        %p238 = pneg %p87
        %p239 = pneg %p118
        %p240 = pneg %p115
        %s241 = sand.u32 %s105, 1
        %s242 = scalar_lea.sflag [#allocation4], %s241
        %s243 = sand.u32 %s105, 1
        %s244 = smul.addr %s243, 4
        %s245 = scalar_lea.vmem [#allocation7], %s244
        %p246 = pneg %p146
        %p247 = pneg %p143
        %s248 = sand.u32 %s133, 1
        %s249 = scalar_lea.sflag [#allocation9], %s248
        %s250 = sand.u32 %s133, 1
        %s251 = smul.addr %s250, 8
        %s252 = scalar_lea.vmem [#allocation8], %s251
        %v253 = vld [vmem:[%s213] sm:$0xf]
        %v254 = vmax.f32 %v253, 1e-05
        %v255 = vlog2.pop %v254
        %v256 = vmul.f32 %v255, 0.6931472
        %v257 = vld [vmem:[%s221] sm:$0x1]
        %v259 = vlaneseq
        %v260 = vshrl.u32 %v259, 7
        %v261 = vsub.s32 0, %v260
        %v262 = vrot.slane %v257, %v261
        %v264 = vmul.f32 %v256, %v262
        %vm265 = vcmask 125952
        %266 = vst.msk [vmem:[%s245] sm:$0xf] %vm265, %v264
        %v267 = vsel %vm265, %v264, 0.0
        %268 = vadd.xlane.f32.xlu0 %v267
        %v269 = vpop.xlane.xlu0 %268
        %v270 = vrot.slane %v269, 4
        %v271 = vadd.f32 %v269, %v270
        %v272 = vrot.slane %v271, 2
        %v273 = vadd.f32 %v271, %v272
        %v274 = vrot.slane %v273, 1
        %v275 = vadd.f32 %v273, %v274
        %s276 = vtos %v275
        %s277 = ssub.f32 0.0, %s276
        %v278 = vstv %s277
        %279 = vst [vmem:[%s252] sm:$0xff] %v278
        %s280 = sand.u32 %s105, 1
        %s281 = scalar_lea.sflag [#allocation4], %s280
        %s282 = sand.u32 %s105, 1
        %s283 = smul.addr %s282, 4
        %s284 = scalar_lea.vmem [#allocation7], %s283
        %s285 = sand.u32 %s133, 1
        %s286 = scalar_lea.sflag [#allocation9], %s285
        %s287 = sand.u32 %s133, 1
        %s288 = smul.addr %s287, 8
        %s289 = scalar_lea.vmem [#allocation8], %s288
        // Predicated region
        $region37: #{tpu_custom_call.1} parent=27 // pred_check
          %p290 = pneg %p115
        $region38: #{tpu_custom_call.1} parent=27 // pred_check_branch
          %292 = sbr.rel (%p290) target = $region40
        $region39: #{tpu_custom_call.1} parent=27 // pred_region
          %s294 = ssub.s32 64, 64
          %295 = vsyncadd %s281, %s294
          %s296 = sadd.s32 %s32, %s31
          %s297 = smul.addr %s296, 64
          %s298 = scalar_lea.hbm %s2, %s297
          %s300 = sshll.u32 %s284, 4
          %s301 = int_to_ptr.vmem [resolvable:$true] %s300
          %303 = dma.vmem_to_hbm [thread:$0]  %s301, 64, %s298, %s281
        $region40: #{tpu_custom_call.1} parent=27 // pred_fallthru
          _
        // Predicated region
        $region41: #{tpu_custom_call.1} parent=27 // pred_check
          %p304 = pneg %p143
        $region42: #{tpu_custom_call.1} parent=27 // pred_check_branch
          %306 = sbr.rel (%p304) target = $region44
        $region43: #{tpu_custom_call.1} parent=27 // pred_region
          %s308 = ssub.s32 128, 128
          %309 = vsyncadd %s286, %s308
          %s310 = sadd.s32 %s32, %s31
          %s311 = smul.addr %s310, 128
          %s312 = scalar_lea.hbm %s3, %s311
          %s314 = sshll.u32 %s289, 4
          %s315 = int_to_ptr.vmem [resolvable:$true] %s314
          %317 = dma.vmem_to_hbm [thread:$0]  %s315, 128, %s312, %s286
        $region44: #{tpu_custom_call.1} parent=27 // pred_fallthru
          _
      $region28: #{tpu_custom_call.1} parent=5 // pred_fallthru
        _
      %p318 = scmp.le.s32.totalorder 2, %s22
      // Predicated region
      $region45: #{tpu_custom_call.1} parent=5 // pred_check
        %p319 = pneg %p318
      $region46: #{tpu_custom_call.1} parent=5 // pred_check_branch
        %321 = sbr.rel (%p319) target = $region48
      $region47: #{tpu_custom_call.1} parent=5 // pred_region
        %s322 = ssub.s32 %s22, 2
        // Predicated region
        $region49: #{tpu_custom_call.1} parent=47 // pred_check
          %p323 = pneg %p121
        $region50: #{tpu_custom_call.1} parent=47 // pred_check_branch
          %325 = sbr.rel (%p323) target = $region52
        $region51: #{tpu_custom_call.1} parent=47 // pred_region
          %s326 = sand.u32 %s106, 1
          %s327 = scalar_lea.sflag [#allocation4], %s326
          %s328 = sand.u32 %s106, 1
          %s329 = smul.addr %s328, 4
          %s330 = scalar_lea.vmem [#allocation7], %s329
          %331 = dma.done %s327, 64
        $region52: #{tpu_custom_call.1} parent=47 // pred_fallthru
          _
        // Predicated region
        $region53: #{tpu_custom_call.1} parent=47 // pred_check
          %p332 = pneg %p149
        $region54: #{tpu_custom_call.1} parent=47 // pred_check_branch
          %334 = sbr.rel (%p332) target = $region56
        $region55: #{tpu_custom_call.1} parent=47 // pred_region
          %s335 = sand.u32 %s134, 1
          %s336 = scalar_lea.sflag [#allocation9], %s335
          %s337 = sand.u32 %s134, 1
          %s338 = smul.addr %s337, 8
          %s339 = scalar_lea.vmem [#allocation8], %s338
          %340 = dma.done %s336, 128
        $region56: #{tpu_custom_call.1} parent=47 // pred_fallthru
          _
      $region48: #{tpu_custom_call.1} parent=5 // pred_fallthru
        _
    $region6: #{tpu_custom_call.1} parent=1 // loop_footer
      %s26 = sadd.s32 1, %s22
    $region7: #{tpu_custom_call.1} parent=1 // loop_footer_branch
      %21 = sbr.rel target = $region3
    $region8: #{tpu_custom_call.1} parent=1 // loop_exit
      _
    %341 = vsyncpa [#allocation3], 1
    %s342 = scalar_lea.sflag [#allocation3], 1
    %343 = vsyncpa %s342, 1
    %344 = vsyncpa [#allocation6], 1
    %s345 = scalar_lea.sflag [#allocation6], 1
    %346 = vsyncpa %s345, 1
    %347 = vsyncpa [#allocation4], 1
    %s348 = scalar_lea.sflag [#allocation4], 1
    %349 = vsyncpa %s348, 1
    %350 = vsyncpa [#allocation9], 1
    %s351 = scalar_lea.sflag [#allocation9], 1
    %352 = vsyncpa %s351, 1

</llo_original>
